<compile_context>
chip_gen: v6e
topology: v6e:2x2x1
jax: 0.10.0
libtpu: 0.0.40
codegen_flags: <defaults>
</compile_context>

<pallas_src>
import jax
import jax.numpy as jnp
from jax.experimental import pallas as pl
from jax.experimental.pallas import tpu as pltpu


_LANE = 128


def _cdiv(a: int, b: int) -> int:
    return -(-a // b)


def _round_up(n: int, m: int) -> int:
    return _cdiv(n, m) * m


def _choose_tiling(batch: int, tile_b: int):
    """Pick (tile_b, num_tiles). Keeps tile_b <= batch for B >= 128 (no batch pad needed)
    and prefers an even number of grid steps for large batches (v7x megacore)."""
    if batch < _LANE:
        return _round_up(max(batch, 1), 8), 1
    tb = min(_round_up(tile_b, _LANE), (batch // _LANE) * _LANE)
    tb = max(tb, _LANE)
    nt = _cdiv(batch, tb)
    # v7x has 2 TensorCores; never collapse a big batch into a single grid step and prefer
    # an even tile count so the ("parallel",) axis splits evenly. No-op on v5e/v6e.
    if nt % 2 == 1 and batch >= 2 * _LANE:
        tb2 = max(_LANE, _round_up(_cdiv(batch, nt + 1), _LANE))
        if tb2 <= (batch // _LANE) * _LANE:
            nt2 = _cdiv(batch, tb2)
            if nt2 % 2 == 0:
                tb, nt = tb2, nt2
    return tb, nt


def _mlp_kernel(x_ref, w1_ref, w2_ref, slab_ref, o_ref):
    """One batch tile of the 3-layer MLP.

    x_ref    : (TILE_B, D)   compute dtype (f32 or bf16) — unpadded feature dim
    w1_ref   : (D, H)        compute dtype (resident)
    w2_ref   : (H, H)        compute dtype (resident)
    slab_ref : (4, H) f32    rows = [w3_row, b1, b2, b3@col0]
    o_ref    : (1, 1, TILE_B) f32  lane-dense output row for this tile
    """
    w3_row = slab_ref[0:1, :]           # (1, H) f32
    b1 = slab_ref[1:2, :]               # (1, H) f32
    b2 = slab_ref[2:3, :]               # (1, H) f32
    b3 = slab_ref[3:4, 0:1]             # (1, 1) f32

    # Layer 1: MXU matmul with f32 accumulation; bias + ReLU on the VPU in f32.
    h1 = jnp.dot(x_ref[...], w1_ref[...], preferred_element_type=jnp.float32)
    h1 = jnp.maximum(h1 + b1, 0.0)

    # Layer 2.
    h2 = jnp.dot(h1.astype(w2_ref.dtype), w2_ref[...],
                 preferred_element_type=jnp.float32)
    h2 = jnp.maximum(h2 + b2, 0.0)

    # Output head: contract (1,H) against (TILE_B,H) over H (q@k^T pattern) so the result
    # is already a lane-dense (1, TILE_B) row — unmasked full-vreg stores, no (TILE_B, 1)
    # column with masked vst.msk.
    y = jax.lax.dot_general(w3_row, h2,
                            dimension_numbers=(((1,), (1,)), ((), ())),
                            preferred_element_type=jnp.float32)
    o_ref[0] = (y + b3).astype(o_ref.dtype)


def prepare_params(params, compute_dtype=jnp.bfloat16):
    """One-time parameter prep (cache the result across forward calls).

    Returns matmul operands in `compute_dtype` and a small f32 slab holding
    [w3_row; b1; b2; b3] so the kernel takes only 4 inputs.
    """
    w1 = jnp.asarray(params["W1"])
    w2 = jnp.asarray(params["W2"])
    H = w1.shape[1]
    slab = jnp.zeros((4, H), jnp.float32)
    slab = slab.at[0, :].set(jnp.asarray(params["W3"]).reshape(-1).astype(jnp.float32))
    slab = slab.at[1, :].set(jnp.asarray(params["b1"]).reshape(-1).astype(jnp.float32))
    slab = slab.at[2, :].set(jnp.asarray(params["b2"]).reshape(-1).astype(jnp.float32))
    slab = slab.at[3, 0].set(jnp.asarray(params["b3"]).reshape(()).astype(jnp.float32))
    return {"W1": w1.astype(compute_dtype),
            "W2": w2.astype(compute_dtype),
            "slab": slab}


def stock_regressor_forward(x, prepared, *, tile_b=2048):
    """Forward pass of StockRegressor via a single batched Pallas call.

    x: (B, input_size); prepared: output of prepare_params().
    Returns (B, 1) float32, matching relu(relu(x@W1+b1)@W2+b2)@W3+b3.
    """
    B, D = x.shape
    w1p, w2p, slab = prepared["W1"], prepared["W2"], prepared["slab"]
    H = w1p.shape[1]
    compute_dtype = w1p.dtype

    tb, nt = _choose_tiling(B, tile_b)

    xq = x if x.dtype == compute_dtype else x.astype(compute_dtype)
    # Only tiny batches (B < 128) are materially padded; large batches rely on Pallas's
    # ragged-last-block handling (pad rows of the final tile are undefined, and the
    # corresponding output rows are sliced away below).
    if tb > B:
        xq = jnp.pad(xq, ((0, tb - B), (0, 0)))

    # Real (unpadded) cost numbers so XLA doesn't over-serialize around a tiny kernel.
    flops = 2 * B * (D * H + H * H + H)
    bytes_accessed = (B * D * jnp.dtype(compute_dtype).itemsize
                      + (w1p.size + w2p.size) * jnp.dtype(compute_dtype).itemsize
                      + slab.size * 4
                      + B * 4)

    out = pl.pallas_call(
        _mlp_kernel,
        out_shape=jax.ShapeDtypeStruct((nt, 1, tb), jnp.float32),
        grid=(nt,),
        in_specs=[
            pl.BlockSpec((tb, D), lambda i: (i, 0)),   # x batch tile (unpadded D)
            pl.BlockSpec((D, H), lambda i: (0, 0)),    # W1 (resident)
            pl.BlockSpec((H, H), lambda i: (0, 0)),    # W2 (resident)
            pl.BlockSpec((4, H), lambda i: (0, 0)),    # [w3_row; b1; b2; b3]
        ],
        out_specs=pl.BlockSpec((1, 1, tb), lambda i: (i, 0, 0)),
        compiler_params=pltpu.CompilerParams(
            dimension_semantics=("parallel",),
        ),
        cost_estimate=pl.CostEstimate(
            flops=flops, transcendentals=0, bytes_accessed=bytes_accessed),
    )(xq, w1p, w2p, slab)

    # (num_tiles, 1, TILE_B) lane-dense slab -> (B, 1) column.
    return out.reshape(nt * tb, 1)[:B]


def init_params(key, input_size, hidden_size=32):
    """Deterministic init mimicking nn.Linear's U(-1/sqrt(fan_in), 1/sqrt(fan_in))."""
    k1, k2, k3, k4, k5, k6 = jax.random.split(key, 6)

    def uniform(k, shape, fan_in):
        bound = 1.0 / jnp.sqrt(fan_in)
        return jax.random.uniform(k, shape, jnp.float32, -bound, bound)

    return {
        "W1": uniform(k1, (input_size, hidden_size), input_size),
        "b1": uniform(k2, (1, hidden_size), input_size),
        "W2": uniform(k3, (hidden_size, hidden_size), hidden_size),
        "b2": uniform(k4, (1, hidden_size), hidden_size),
        "W3": uniform(k5, (hidden_size, 1), hidden_size),
        "b3": uniform(k6, (1, 1), hidden_size),
    }


def _reference_forward(x, p):
    hi = jax.lax.Precision.HIGHEST
    h = jnp.maximum(jnp.dot(x, p["W1"], precision=hi) + p["b1"], 0.0)
    h = jnp.maximum(jnp.dot(h, p["W2"], precision=hi) + p["b2"], 0.0)
    return jnp.dot(h, p["W3"], precision=hi) + p["b3"]


if __name__ == "__main__":
    key = jax.random.PRNGKey(0)
    k_params, k_x, k_x2 = jax.random.split(key, 3)

    batch = 8
    input_size = 16
    hidden_size = 32

    params = init_params(k_params, input_size, hidden_size)
    prep_f32 = prepare_params(params, compute_dtype=jnp.float32)   # exact-parity path
    prep_bf16 = prepare_params(params)                             # default bf16 operands

    fwd = jax.jit(stock_regressor_forward)

    # Small batch (matches the original module's typical usage).
    x = jax.random.normal(k_x, (batch, input_size), jnp.float32)
    y_ref = _reference_forward(x, params)

    y = jax.block_until_ready(fwd(x, prep_f32))
    assert y.shape == (batch, 1)
    assert jnp.allclose(y, y_ref, atol=1e-4, rtol=1e-4), float(jnp.max(jnp.abs(y - y_ref)))

    y16 = jax.block_until_ready(fwd(x, prep_bf16))
    assert y16.shape == (batch, 1)
    assert jnp.allclose(y16, y_ref, atol=5e-2, rtol=5e-2), float(jnp.max(jnp.abs(y16 - y_ref)))

    # Larger, non-tile-aligned batch: multi-tile grid + ragged (unpadded) last block.
    big = 1000
    xb = jax.random.normal(k_x2, (big, input_size), jnp.float32)
    yb_ref = _reference_forward(xb, params)

    yb = jax.block_until_ready(fwd(xb, prep_f32))
    assert yb.shape == (big, 1)
    assert jnp.allclose(yb, yb_ref, atol=1e-4, rtol=1e-4), float(jnp.max(jnp.abs(yb - yb_ref)))

    yb16 = jax.block_until_ready(fwd(xb, prep_bf16))
    assert jnp.allclose(yb16, yb_ref, atol=5e-2, rtol=5e-2), float(jnp.max(jnp.abs(yb16 - yb_ref)))

    print("KERNEL_OK")
</pallas_src>

<mosaic_0001>
module attributes {stable_mosaic.version = 11 : i64} {
  func.func @_mlp_kernel(%arg0: i32, %arg1: memref<8x16xf32, #tpu.memory_space<vmem>>, %arg2: memref<16x32xf32, #tpu.memory_space<vmem>>, %arg3: memref<32x32xf32, #tpu.memory_space<vmem>>, %arg4: memref<4x32xf32, #tpu.memory_space<vmem>>, %arg5: memref<1x1x8xf32, #tpu.memory_space<vmem>>) attributes {dimension_semantics = [#tpu.dimension_semantics<parallel>], iteration_bounds = array<i64: 1>, scalar_prefetch = 0 : i64, scratch_operands = 0 : i64, tpu.core_type = #tpu.core_type<tc>, window_params = [{transform_indices = @transform_0, window_bounds = array<i64: 8, 16>}, {pipeline_mode = #tpu.pipeline_mode<synchronous>, transform_indices = @transform_1, window_bounds = array<i64: 16, 32>}, {pipeline_mode = #tpu.pipeline_mode<synchronous>, transform_indices = @transform_2, window_bounds = array<i64: 32, 32>}, {pipeline_mode = #tpu.pipeline_mode<synchronous>, transform_indices = @transform_3, window_bounds = array<i64: 4, 32>}, {transform_indices = @transform_4, window_bounds = array<i64: 1, 1, 8>}]} {
    %c0 = arith.constant 0 : index
    %c0_0 = arith.constant 0 : index
    %0 = vector.load %arg4[%c0, %c0_0] : memref<4x32xf32, #tpu.memory_space<vmem>>, vector<1x32xf32>
    %c1 = arith.constant 1 : index
    %c0_1 = arith.constant 0 : index
    %1 = vector.load %arg4[%c1, %c0_1] : memref<4x32xf32, #tpu.memory_space<vmem>>, vector<1x32xf32>
    %c2 = arith.constant 2 : index
    %c0_2 = arith.constant 0 : index
    %2 = vector.load %arg4[%c2, %c0_2] : memref<4x32xf32, #tpu.memory_space<vmem>>, vector<1x32xf32>
    %c3 = arith.constant 3 : index
    %c0_3 = arith.constant 0 : index
    %3 = vector.load %arg4[%c3, %c0_3] : memref<4x32xf32, #tpu.memory_space<vmem>>, vector<1x1xf32>
    %c0_4 = arith.constant 0 : index
    %c0_5 = arith.constant 0 : index
    %4 = vector.load %arg1[%c0_4, %c0_5] : memref<8x16xf32, #tpu.memory_space<vmem>>, vector<8x16xf32>
    %c0_6 = arith.constant 0 : index
    %c0_7 = arith.constant 0 : index
    %5 = vector.load %arg2[%c0_6, %c0_7] : memref<16x32xf32, #tpu.memory_space<vmem>>, vector<16x32xf32>
    %cst = arith.constant dense<0.000000e+00> : vector<8x32xf32>
    %6 = tpu.matmul %4, %5, %cst {dimension_numbers = #tpu.dot_dimension_numbers<[1], [0], [0], [1], [0, 0, 1, 1], [], []>} : vector<8x16xf32>, vector<16x32xf32>, vector<8x32xf32> -> vector<8x32xf32>
    %7 = vector.broadcast %1 : vector<1x32xf32> to vector<8x32xf32>
    %8 = arith.addf %6, %7 : vector<8x32xf32>
    %cst_8 = arith.constant 0.000000e+00 : f32
    %9 = vector.broadcast %cst_8 : f32 to vector<8x32xf32>
    %10 = arith.maximumf %8, %9 : vector<8x32xf32>
    %c0_9 = arith.constant 0 : index
    %c0_10 = arith.constant 0 : index
    %11 = vector.load %arg3[%c0_9, %c0_10] : memref<32x32xf32, #tpu.memory_space<vmem>>, vector<32x32xf32>
    %cst_11 = arith.constant dense<0.000000e+00> : vector<8x32xf32>
    %12 = tpu.matmul %10, %11, %cst_11 {dimension_numbers = #tpu.dot_dimension_numbers<[1], [0], [0], [1], [0, 0, 1, 1], [], []>} : vector<8x32xf32>, vector<32x32xf32>, vector<8x32xf32> -> vector<8x32xf32>
    %13 = vector.broadcast %2 : vector<1x32xf32> to vector<8x32xf32>
    %14 = arith.addf %12, %13 : vector<8x32xf32>
    %cst_12 = arith.constant 0.000000e+00 : f32
    %15 = vector.broadcast %cst_12 : f32 to vector<8x32xf32>
    %16 = arith.maximumf %14, %15 : vector<8x32xf32>
    %cst_13 = arith.constant dense<0.000000e+00> : vector<1x8xf32>
    %17 = tpu.matmul %0, %16, %cst_13 {dimension_numbers = #tpu.dot_dimension_numbers<[1], [1], [0], [0], [0, 0, 1, 0], [], []>} : vector<1x32xf32>, vector<8x32xf32>, vector<1x8xf32> -> vector<1x8xf32>
    %18 = vector.broadcast %3 : vector<1x1xf32> to vector<1x8xf32>
    %19 = arith.addf %17, %18 : vector<1x8xf32>
    %c0_14 = arith.constant 0 : index
    %c0_15 = arith.constant 0 : index
    %c0_16 = arith.constant 0 : index
    %20 = vector.load %arg5[%c0_14, %c0_15, %c0_16] : memref<1x1x8xf32, #tpu.memory_space<vmem>>, vector<1x1x8xf32>
    %21 = vector.shape_cast %20 : vector<1x1x8xf32> to vector<1x8xf32>
    %22 = vector.shape_cast %19 : vector<1x8xf32> to vector<1x1x8xf32>
    tpu.vector_store %arg5[%c0_14, %c0_15, %c0_16], %22 {strides = array<i32>} : memref<1x1x8xf32, #tpu.memory_space<vmem>>, vector<1x1x8xf32>,
    return
  }
  func.func @transform_0(%arg0: i32) -> (i32, i32) {
    %c0_i32 = arith.constant 0 : i32
    %c0_i32_0 = arith.constant 0 : i32
    return %arg0, %c0_i32 : i32, i32
  }
  func.func @transform_1(%arg0: i32) -> (i32, i32) {
    %c0_i32 = arith.constant 0 : i32
    %c0_i32_0 = arith.constant 0 : i32
    %c0_i32_1 = arith.constant 0 : i32
    return %c0_i32, %c0_i32_0 : i32, i32
  }
  func.func @transform_2(%arg0: i32) -> (i32, i32) {
    %c0_i32 = arith.constant 0 : i32
    %c0_i32_0 = arith.constant 0 : i32
    %c0_i32_1 = arith.constant 0 : i32
    return %c0_i32, %c0_i32_0 : i32, i32
  }
  func.func @transform_3(%arg0: i32) -> (i32, i32) {
    %c0_i32 = arith.constant 0 : i32
    %c0_i32_0 = arith.constant 0 : i32
    %c0_i32_1 = arith.constant 0 : i32
    return %c0_i32, %c0_i32_0 : i32, i32
  }
  func.func @transform_4(%arg0: i32) -> (i32, i32, i32) {
    %c0_i32 = arith.constant 0 : i32
    %c0_i32_0 = arith.constant 0 : i32
    %c0_i32_1 = arith.constant 0 : i32
    return %arg0, %c0_i32, %c0_i32_0 : i32, i32, i32
  }
}

</mosaic_0001>

<llo_original>
// kernel: stock_regressor_forward.1
$region0: #{stock_regressor_forward.1}
  #allocation0 [shape = 'u32[]', space=smem, size = 0x4, offset = 0x4, fixed_abs, tag = 'smem constant byte address 0x4 - core index']
  #allocation1 [shape = 'u32[144,128]{1,0:T(1,128)}', space=vmem, size = 0x12000, scoped, tag = 'internal scratch']
  %s0 = inlined_call_operand.hbm [shape: f32[8,16], index: 0, kind: input, shape index: {}]
  %s1 = inlined_call_operand.hbm [shape: f32[16,32], index: 1, kind: input, shape index: {}]
  %s2 = inlined_call_operand.hbm [shape: f32[32,32], index: 2, kind: input, shape index: {}]
  %s3 = inlined_call_operand.vmem [shape: f32[4,32], index: 3, kind: input, shape index: {}]
  %s4 = inlined_call_operand.hbm [shape: f32[1,1,8], index: 4, kind: output, shape index: {}]
  %s5 = sld [smem:[#allocation0]]
  $region38: #{stock_regressor_forward.1} parent=0
    _
  %s7 = ssub.s32 1, %s5
  %s8 = scalar_select 0, %s7, %s5
  $region1: #{stock_regressor_forward.1} parent=0
    #allocation2 [shape = 'u8[4096]{0}', space=vmem, size = 0x1000, scoped, tag = 'input window, operand 0, single buffered']
    #allocation3 [shape = 's32[1]{0}', space=sflag, size = 0x4, scoped, tag = 'scoped memory for stock_regressor_forward.1']
    #allocation4 [shape = 's32[1]{0}', space=sflag, size = 0x4, scoped, tag = 'scoped memory for stock_regressor_forward.1']
    #allocation5 [shape = 'u8[8192]{0}', space=vmem, size = 0x2000, scoped, tag = 'input window, operand 1, single buffered']
    #allocation6 [shape = 's32[1]{0}', space=sflag, size = 0x4, scoped, tag = 'scoped memory for stock_regressor_forward.1']
    #allocation7 [shape = 'u8[16384]{0}', space=vmem, size = 0x4000, scoped, tag = 'input window, operand 2, single buffered']
    #allocation8 [shape = 'u8[512]{0}', space=vmem, size = 0x400, scoped, tag = 'output window, operand 0, single buffered']
    %9 = vsyncpa [#allocation3], 0
    %10 = vsyncpa [#allocation6], 0
    %11 = vsyncpa [#allocation4], 0
    // Predicated region
    $region2: #{stock_regressor_forward.1} parent=1 // pred_check
      _
    $region3: #{stock_regressor_forward.1} parent=1 // pred_check_branch
      %13 = sbr.rel (0) target = $region5
    $region4: #{stock_regressor_forward.1} parent=1 // pred_region
      %s15 = ssub.s32 128, 128
      %16 = vsyncadd [#allocation3], %s15
      %s18 = sshll.u32 [#allocation2], 4
      %s19 = int_to_ptr.vmem [resolvable:$true] %s18
      %21 = dma.hbm_to_vmem [thread:$0]  %s0, 128, %s19, [#allocation3]
    $region5: #{stock_regressor_forward.1} parent=1 // pred_fallthru
      _
    // Predicated region
    $region6: #{stock_regressor_forward.1} parent=1 // pred_check
      _
    $region7: #{stock_regressor_forward.1} parent=1 // pred_check_branch
      %23 = sbr.rel (0) target = $region9
    $region8: #{stock_regressor_forward.1} parent=1 // pred_region
      %s25 = ssub.s32 256, 256
      %26 = vsyncadd [#allocation6], %s25
      %s27 = sshll.u32 [#allocation5], 4
      %s28 = int_to_ptr.vmem [resolvable:$true] %s27
      %33 = dma.hbm_to_vmem [thread:$0]  %s1, 256, %s28, [#allocation6], 128, 128, 8
    $region9: #{stock_regressor_forward.1} parent=1 // pred_fallthru
      _
    // Predicated region
    $region10: #{stock_regressor_forward.1} parent=1 // pred_check
      _
    $region11: #{stock_regressor_forward.1} parent=1 // pred_check_branch
      %35 = sbr.rel (0) target = $region13
    $region12: #{stock_regressor_forward.1} parent=1 // pred_region
      %s37 = ssub.s32 512, 512
      %38 = vsyncadd [#allocation6], %s37
      %s39 = sshll.u32 [#allocation7], 4
      %s40 = int_to_ptr.vmem [resolvable:$true] %s39
      %45 = dma.hbm_to_vmem [thread:$0]  %s2, 512, %s40, [#allocation6], 128, 128, 8
    $region13: #{stock_regressor_forward.1} parent=1 // pred_fallthru
      _
    // Predicated region
    $region14: #{stock_regressor_forward.1} parent=1 // pred_check
      _
    $region15: #{stock_regressor_forward.1} parent=1 // pred_check_branch
      %47 = sbr.rel (0) target = $region17
    $region16: #{stock_regressor_forward.1} parent=1 // pred_region
      _
    $region17: #{stock_regressor_forward.1} parent=1 // pred_fallthru
      _
    // Predicated region
    $region18: #{stock_regressor_forward.1} parent=1 // pred_check
      _
    $region19: #{stock_regressor_forward.1} parent=1 // pred_check_branch
      %49 = sbr.rel (0) target = $region21
    $region20: #{stock_regressor_forward.1} parent=1 // pred_region
      %50 = dma.done [#allocation3], 128
    $region21: #{stock_regressor_forward.1} parent=1 // pred_fallthru
      _
    // Predicated region
    $region22: #{stock_regressor_forward.1} parent=1 // pred_check
      _
    $region23: #{stock_regressor_forward.1} parent=1 // pred_check_branch
      %52 = sbr.rel (0) target = $region25
    $region24: #{stock_regressor_forward.1} parent=1 // pred_region
      %53 = dma.done [#allocation6], 256
    $region25: #{stock_regressor_forward.1} parent=1 // pred_fallthru
      _
    // Predicated region
    $region26: #{stock_regressor_forward.1} parent=1 // pred_check
      _
    $region27: #{stock_regressor_forward.1} parent=1 // pred_check_branch
      %55 = sbr.rel (0) target = $region29
    $region28: #{stock_regressor_forward.1} parent=1 // pred_region
      %56 = dma.done [#allocation6], 512
    $region29: #{stock_regressor_forward.1} parent=1 // pred_fallthru
      _
    %v57 = vld [vmem:[%s3] sm:$0x1]
    %v58 = vld [vmem:[%s3 + $0x1] sm:$0x1]
    %v59 = vld [vmem:[%s3 + $0x2] sm:$0x1]
    %v60 = vld [vmem:[%s3 + $0x3] sm:$0x1]
    %v61 = vld [vmem:[#allocation2] sm:$0xff]
    %v62 = vld [vmem:[#allocation5] sm:$0xff]
    %v63 = vld [vmem:[#allocation5 + $0x8] sm:$0xff]
    %v64 = vlaneseq
    %v65 = vshrl.u32 %v64, 7
    %v66 = vsub.s32 0, %v65
    %v67 = vrot.slane %v58, %v66
    %vm68 = vcmask 130048
    %v70 = vsel %vm68, %v61, 0
    %72 = vmatprep.subr.mxu0 0.0
    %73 = vmatpush1.msra.mxu0 0.0
    %74 = vmatprep.subr.mxu0 0.0
    %75 = vmatpush1.msra.mxu0 0.0
    %76 = vmatprep.subr.mxu0 0.0
    %77 = vmatpush1.msra.mxu0 0.0
    %78 = vmatprep.subr.mxu0 0.0
    %79 = vmatpush1.msra.mxu0 0.0
    %80 = vmatprep.subr.mxu0 0.0
    %81 = vmatpush1.msra.mxu0 0.0
    %82 = vmatprep.subr.mxu0 0.0
    %83 = vmatpush1.msra.mxu0 0.0
    %84 = vmatprep.subr.mxu0 0.0
    %85 = vmatpush1.msra.mxu0 0.0
    %86 = vmatprep.subr.mxu0 0.0
    %87 = vmatpush1.msra.mxu0 0.0
    %88 = vmatprep.subr.mxu0 0.0
    %89 = vmatpush1.msra.mxu0 0.0
    %90 = vmatprep.subr.mxu0 0.0
    %91 = vmatpush1.msra.mxu0 0.0
    %92 = vmatprep.subr.mxu0 0.0
    %93 = vmatpush1.msra.mxu0 0.0
    %94 = vmatprep.subr.mxu0 0.0
    %95 = vmatpush1.msra.mxu0 0.0
    %96 = vmatprep.subr.mxu0 0.0
    %97 = vmatpush1.msra.mxu0 0.0
    %98 = vmatprep.subr.mxu0 0.0
    %99 = vmatpush1.msra.mxu0 0.0
    %100 = vmatprep.subr.mxu0 0.0
    %101 = vmatpush1.msra.mxu0 %v63
    %102 = vmatprep.subr.mxu0 0.0
    %103 = vmatpush1.msra.mxu0 %v62
    %104 = vmatprep.subr.mxu0 0.0
    %105 = vmatpush2.msra.mxu0 0.0
    %106 = vmatprep.subr.mxu0 0.0
    %107 = vmatpush2.msra.mxu0 0.0
    %108 = vmatprep.subr.mxu0 0.0
    %109 = vmatpush2.msra.mxu0 0.0
    %110 = vmatprep.subr.mxu0 0.0
    %111 = vmatpush2.msra.mxu0 0.0
    %112 = vmatprep.subr.mxu0 0.0
    %113 = vmatpush2.msra.mxu0 0.0
    %114 = vmatprep.subr.mxu0 0.0
    %115 = vmatpush2.msra.mxu0 0.0
    %116 = vmatprep.subr.mxu0 0.0
    %117 = vmatpush2.msra.mxu0 0.0
    %118 = vmatprep.subr.mxu0 0.0
    %119 = vmatpush2.msra.mxu0 0.0
    %120 = vmatprep.subr.mxu0 0.0
    %121 = vmatpush2.msra.mxu0 0.0
    %122 = vmatprep.subr.mxu0 0.0
    %123 = vmatpush2.msra.mxu0 0.0
    %124 = vmatprep.subr.mxu0 0.0
    %125 = vmatpush2.msra.mxu0 0.0
    %126 = vmatprep.subr.mxu0 0.0
    %127 = vmatpush2.msra.mxu0 0.0
    %128 = vmatprep.subr.mxu0 0.0
    %129 = vmatpush2.msra.mxu0 0.0
    %130 = vmatprep.subr.mxu0 0.0
    %131 = vmatpush2.msra.mxu0 0.0
    %132 = vmatprep.subr.mxu0 0.0
    %133 = vmatpush2.msra.mxu0 0.0
    %134 = vmatprep.subr.mxu0 0.0
    %135 = vmatpush2.msra.mxu0 0.0
    %136 = vmatprep.mubr.f32.mxu0 0.0
    %137 = vmatmul.mubr.f32.gmra.mxu0 %v70
    %v138 = vpop.f32.mrf.mxu0
    %v139 = vadd.f32 %v67, %v138
    %v140 = vpop.f32.mrf.mxu0
    %141 = vdwg.mxu0
    %v142 = vmax.f32 %v139, 0.0
    %v143 = vld [vmem:[#allocation7] sm:$0xff]
    %v144 = vld [vmem:[#allocation7 + $0x8] sm:$0xff]
    %v145 = vld [vmem:[#allocation7 + $0x10] sm:$0xff]
    %v146 = vld [vmem:[#allocation7 + $0x18] sm:$0xff]
    %v147 = vlaneseq
    %v148 = vshrl.u32 %v147, 7
    %v149 = vsub.s32 0, %v148
    %v150 = vrot.slane %v59, %v149
    %vm151 = vcmask 261120
    %v153 = vsel %vm151, %v142, 0
    %155 = vmatprep.subr.mxu0 0.0
    %156 = vmatpush1.msra.mxu0 0.0
    %157 = vmatprep.subr.mxu0 0.0
    %158 = vmatpush1.msra.mxu0 0.0
    %159 = vmatprep.subr.mxu0 0.0
    %160 = vmatpush1.msra.mxu0 0.0
    %161 = vmatprep.subr.mxu0 0.0
    %162 = vmatpush1.msra.mxu0 0.0
    %163 = vmatprep.subr.mxu0 0.0
    %164 = vmatpush1.msra.mxu0 0.0
    %165 = vmatprep.subr.mxu0 0.0
    %166 = vmatpush1.msra.mxu0 0.0
    %167 = vmatprep.subr.mxu0 0.0
    %168 = vmatpush1.msra.mxu0 0.0
    %169 = vmatprep.subr.mxu0 0.0
    %170 = vmatpush1.msra.mxu0 0.0
    %171 = vmatprep.subr.mxu0 0.0
    %172 = vmatpush1.msra.mxu0 0.0
    %173 = vmatprep.subr.mxu0 0.0
    %174 = vmatpush1.msra.mxu0 0.0
    %175 = vmatprep.subr.mxu0 0.0
    %176 = vmatpush1.msra.mxu0 0.0
    %177 = vmatprep.subr.mxu0 0.0
    %178 = vmatpush1.msra.mxu0 0.0
    %179 = vmatprep.subr.mxu0 0.0
    %180 = vmatpush1.msra.mxu0 %v146
    %181 = vmatprep.subr.mxu0 0.0
    %182 = vmatpush1.msra.mxu0 %v145
    %183 = vmatprep.subr.mxu0 0.0
    %184 = vmatpush1.msra.mxu0 %v144
    %185 = vmatprep.subr.mxu0 0.0
    %186 = vmatpush1.msra.mxu0 %v143
    %187 = vmatprep.subr.mxu0 0.0
    %188 = vmatpush2.msra.mxu0 0.0
    %189 = vmatprep.subr.mxu0 0.0
    %190 = vmatpush2.msra.mxu0 0.0
    %191 = vmatprep.subr.mxu0 0.0
    %192 = vmatpush2.msra.mxu0 0.0
    %193 = vmatprep.subr.mxu0 0.0
    %194 = vmatpush2.msra.mxu0 0.0
    %195 = vmatprep.subr.mxu0 0.0
    %196 = vmatpush2.msra.mxu0 0.0
    %197 = vmatprep.subr.mxu0 0.0
    %198 = vmatpush2.msra.mxu0 0.0
    %199 = vmatprep.subr.mxu0 0.0
    %200 = vmatpush2.msra.mxu0 0.0
    %201 = vmatprep.subr.mxu0 0.0
    %202 = vmatpush2.msra.mxu0 0.0
    %203 = vmatprep.subr.mxu0 0.0
    %204 = vmatpush2.msra.mxu0 0.0
    %205 = vmatprep.subr.mxu0 0.0
    %206 = vmatpush2.msra.mxu0 0.0
    %207 = vmatprep.subr.mxu0 0.0
    %208 = vmatpush2.msra.mxu0 0.0
    %209 = vmatprep.subr.mxu0 0.0
    %210 = vmatpush2.msra.mxu0 0.0
    %211 = vmatprep.subr.mxu0 0.0
    %212 = vmatpush2.msra.mxu0 0.0
    %213 = vmatprep.subr.mxu0 0.0
    %214 = vmatpush2.msra.mxu0 0.0
    %215 = vmatprep.subr.mxu0 0.0
    %216 = vmatpush2.msra.mxu0 0.0
    %217 = vmatprep.subr.mxu0 0.0
    %218 = vmatpush2.msra.mxu0 0.0
    %219 = vmatprep.mubr.f32.mxu0 0.0
    %220 = vmatmul.mubr.f32.gmra.mxu0 %v153
    %v221 = vpop.f32.mrf.mxu0
    %v222 = vadd.f32 %v150, %v221
    %v223 = vpop.f32.mrf.mxu0
    %224 = vdwg.mxu0
    %v225 = vmax.f32 %v222, 0.0
    %227 = vset.pattern.permute.xlu0 0
    %228 = vperm.xlu0 %227, %v60
    %v229 = vpop.permute.xlu0 %228
    %v232 = vsel %vm151, %v57, 0
    %v235 = vsel %vm151, %v225, 0
    %237 = vmatprep.subr.mxu0 0.0
    %238 = vmatpush1.xpose.msra.mxu0 0.0
    %239 = vmatprep.subr.mxu0 0.0
    %240 = vmatpush1.xpose.msra.mxu0 0.0
    %241 = vmatprep.subr.mxu0 0.0
    %242 = vmatpush1.xpose.msra.mxu0 0.0
    %243 = vmatprep.subr.mxu0 0.0
    %244 = vmatpush1.xpose.msra.mxu0 0.0
    %245 = vmatprep.subr.mxu0 0.0
    %246 = vmatpush1.xpose.msra.mxu0 0.0
    %247 = vmatprep.subr.mxu0 0.0
    %248 = vmatpush1.xpose.msra.mxu0 0.0
    %249 = vmatprep.subr.mxu0 0.0
    %250 = vmatpush1.xpose.msra.mxu0 0.0
    %251 = vmatprep.subr.mxu0 0.0
    %252 = vmatpush1.xpose.msra.mxu0 0.0
    %253 = vmatprep.subr.mxu0 0.0
    %254 = vmatpush1.xpose.msra.mxu0 0.0
    %255 = vmatprep.subr.mxu0 0.0
    %256 = vmatpush1.xpose.msra.mxu0 0.0
    %257 = vmatprep.subr.mxu0 0.0
    %258 = vmatpush1.xpose.msra.mxu0 0.0
    %259 = vmatprep.subr.mxu0 0.0
    %260 = vmatpush1.xpose.msra.mxu0 0.0
    %261 = vmatprep.subr.mxu0 0.0
    %262 = vmatpush1.xpose.msra.mxu0 0.0
    %263 = vmatprep.subr.mxu0 0.0
    %264 = vmatpush1.xpose.msra.mxu0 0.0
    %265 = vmatprep.subr.mxu0 0.0
    %266 = vmatpush1.xpose.msra.mxu0 0.0
    %267 = vmatprep.subr.mxu0 0.0
    %268 = vmatpush1.xpose.msra.mxu0 %v235
    %269 = vmatprep.subr.mxu0 0.0
    %270 = vmatpush2.xpose.msra.mxu0 0.0
    %271 = vmatprep.subr.mxu0 0.0
    %272 = vmatpush2.xpose.msra.mxu0 0.0
    %273 = vmatprep.subr.mxu0 0.0
    %274 = vmatpush2.xpose.msra.mxu0 0.0
    %275 = vmatprep.subr.mxu0 0.0
    %276 = vmatpush2.xpose.msra.mxu0 0.0
    %277 = vmatprep.subr.mxu0 0.0
    %278 = vmatpush2.xpose.msra.mxu0 0.0
    %279 = vmatprep.subr.mxu0 0.0
    %280 = vmatpush2.xpose.msra.mxu0 0.0
    %281 = vmatprep.subr.mxu0 0.0
    %282 = vmatpush2.xpose.msra.mxu0 0.0
    %283 = vmatprep.subr.mxu0 0.0
    %284 = vmatpush2.xpose.msra.mxu0 0.0
    %285 = vmatprep.subr.mxu0 0.0
    %286 = vmatpush2.xpose.msra.mxu0 0.0
    %287 = vmatprep.subr.mxu0 0.0
    %288 = vmatpush2.xpose.msra.mxu0 0.0
    %289 = vmatprep.subr.mxu0 0.0
    %290 = vmatpush2.xpose.msra.mxu0 0.0
    %291 = vmatprep.subr.mxu0 0.0
    %292 = vmatpush2.xpose.msra.mxu0 0.0
    %293 = vmatprep.subr.mxu0 0.0
    %294 = vmatpush2.xpose.msra.mxu0 0.0
    %295 = vmatprep.subr.mxu0 0.0
    %296 = vmatpush2.xpose.msra.mxu0 0.0
    %297 = vmatprep.subr.mxu0 0.0
    %298 = vmatpush2.xpose.msra.mxu0 0.0
    %299 = vmatprep.subr.mxu0 0.0
    %300 = vmatpush2.xpose.msra.mxu0 0.0
    %301 = vmatprep.mubr.f32.mxu0 0.0
    %302 = vmatmul.mubr.f32.gmra.mxu0 %v232
    %v303 = vpop.f32.mrf.mxu0
    %v304 = vadd.f32 %v229, %v303
    %v305 = vpop.f32.mrf.mxu0
    %306 = vdwg.mxu0
    %vm307 = vcmask 57344
    %308 = vst.msk [vmem:[#allocation8] sm:$0x1] %vm307, %v304
    // Predicated region
    $region30: #{stock_regressor_forward.1} parent=1 // pred_check
      _
    $region31: #{stock_regressor_forward.1} parent=1 // pred_check_branch
      %310 = sbr.rel (0) target = $region33
    $region32: #{stock_regressor_forward.1} parent=1 // pred_region
      %s312 = ssub.s32 16, 16
      %313 = vsyncadd [#allocation4], %s312
      %s315 = sshll.u32 [#allocation8], 4
      %s316 = int_to_ptr.vmem [resolvable:$true] %s315
      %318 = dma.vmem_to_hbm [thread:$0]  %s316, 16, %s4, [#allocation4]
    $region33: #{stock_regressor_forward.1} parent=1 // pred_fallthru
      _
    // Predicated region
    $region34: #{stock_regressor_forward.1} parent=1 // pred_check
      _
    $region35: #{stock_regressor_forward.1} parent=1 // pred_check_branch
      %320 = sbr.rel (0) target = $region37
    $region36: #{stock_regressor_forward.1} parent=1 // pred_region
      %321 = dma.done [#allocation4], 16
    $region37: #{stock_regressor_forward.1} parent=1 // pred_fallthru
      _
    %322 = vsyncpa [#allocation3], 1
    %323 = vsyncpa [#allocation6], 1
    %324 = vsyncpa [#allocation4], 1

</llo_original>
